<compile_context>
chip_gen: v6e
topology: v6e:2x2x1
jax: 0.10.0
libtpu: 0.0.40
codegen_flags: <defaults>
</compile_context>

<pallas_src>
import jax
import jax.numpy as jnp
from jax.experimental import pallas as pl
from jax.experimental.pallas import tpu as pltpu


def _round_up(v, m):
    return (v + m - 1) // m * m


def _soft_intervention_kernel(
    x_ref,      # (tm, Dp)  bf16
    mask_ref,   # (tm, Dp)  int8 {0,1}
    dov_ref,    # (tm, Dp)  bf16
    alpha_ref,  # (1, Dp)   f32 (pre-sigmoid)
    w1_ref,     # (Dp, Hp)  bf16
    b1_ref,     # (1, Hp)   f32
    w2_ref,     # (Hp, Op)  bf16
    b2_ref,     # (1, Op)   f32
    out_ref,    # (tm, Op)  f32
):
    # Upcast streams to f32 for the elementwise blend (no bf16 VPU on v5e).
    x = x_ref[...].astype(jnp.float32)
    dv = dov_ref[...].astype(jnp.float32)
    m = mask_ref[...].astype(jnp.float32)          # {0, 1}

    # sigmoid goes to the EUP slot (essentially free per tile).
    alpha = jax.nn.sigmoid(alpha_ref[...])         # (1, Dp)

    # Algebraic blend, exact for a binary mask:
    #   m==1 -> (1-alpha)*x + alpha*dv ;  m==0 -> x
    intervened = x + m * (alpha * (dv - x))        # (tm, Dp) f32

    # MXU matmuls in bf16 with f32 accumulation.
    h = jnp.dot(intervened.astype(jnp.bfloat16), w1_ref[...],
                preferred_element_type=jnp.float32)
    h = jnp.maximum(h + b1_ref[...], 0.0)          # ReLU, f32

    out = jnp.dot(h.astype(jnp.bfloat16), w2_ref[...],
                  preferred_element_type=jnp.float32)
    out_ref[...] = (out + b2_ref[...]).astype(out_ref.dtype)


def soft_intervention_forward(x, do_mask, do_values, alpha_raw, w1, b1, w2, b2,
                              *, block_rows=None):
    B, Din = x.shape
    H = w1.shape[1]
    Dout = w2.shape[1]

    f32, bf16 = jnp.float32, jnp.bfloat16

    # Lane-dense feature dims (multiples of 128) -> unmasked loads/stores/MXU.
    Dp = _round_up(Din, 128)
    Hp = _round_up(H, 128)
    Op = _round_up(Dout, 128)

    # ---- generation-aware VMEM budget -------------------------------------
    try:
        vmem_cap = int(pltpu.get_tpu_info().vmem_capacity_bytes)
    except Exception:
        vmem_cap = 64 * 1024 * 1024          # conservative (v7x-sized)
    vmem_limit = max(32 * 1024 * 1024, vmem_cap - 16 * 1024 * 1024)

    if block_rows is None:
        block_rows = 1024 if vmem_cap >= 100 * 1024 * 1024 else 512

    # ---- batch tile: no HBM batch padding; ragged last tile ----------------
    if B <= 64:
        tm = _round_up(B, 8)                 # one tiny tile
    else:
        # >= 2 tiles so v7x's second TensorCore gets work; multiple of 32
        # (int8 mask sublane tiling), capped at block_rows.
        tm = min(block_rows, max(32, _round_up(pl.cdiv(B, 2), 32)))

    weight_bytes = Dp * Hp * 2 + Hp * Op * 2 + (Dp + Hp + Op) * 4

    def _footprint(t):
        # double-buffered streams + (conservatively) double-buffered weights
        stream = t * Dp * (2 + 2 + 1) + t * Op * 4   # x, dv, mask, out
        return 2 * stream + 2 * weight_bytes

    budget = vmem_limit - 4 * 1024 * 1024            # compiler scratch headroom
    while tm > 32 and _footprint(tm) > budget:
        tm = max(32, (tm // 2) // 32 * 32)

    nb = pl.cdiv(B, tm)

    # ---- wrapper-side casts; pad feature dims only when unaligned ----------
    def _prep(a, dtype, rows, cols, r, c):
        a = a.astype(dtype)
        if rows == r and cols == c:
            return a
        return jnp.zeros((rows, cols), dtype).at[:r, :c].set(a)

    # (do_mask != 0) matches do_mask.bool() in the reference, including
    # fractional mask values (any nonzero -> intervene).
    xf  = _prep(x, bf16, B, Dp, B, Din)
    dvf = _prep(do_values, bf16, B, Dp, B, Din)
    mi8 = _prep((do_mask != 0), jnp.int8, B, Dp, B, Din)
    af  = _prep(alpha_raw.reshape(1, Din), f32, 1, Dp, 1, Din)
    w1p = _prep(w1, bf16, Dp, Hp, Din, H)
    b1p = _prep(b1.reshape(1, H), f32, 1, Hp, 1, H)
    w2p = _prep(w2, bf16, Hp, Op, H, Dout)
    b2p = _prep(b2.reshape(1, Dout), f32, 1, Op, 1, Dout)

    rows = nb * tm
    flops = 2 * rows * Dp * Hp + 2 * rows * Hp * Op + 6 * rows * Dp
    bytes_accessed = (B * Dp * (2 + 2 + 1)   # x, dv (bf16) + mask (int8)
                      + B * Op * 4           # output (f32)
                      + weight_bytes)        # resident weights/biases/alpha
    cost = pl.CostEstimate(flops=flops, transcendentals=nb * Dp,
                           bytes_accessed=bytes_accessed)

    def _call(use_buffered):
        def resident(shape):
            if use_buffered:
                # Constant block index -> never re-DMA'd; single buffer halves
                # the resident VMEM footprint.
                return pl.BlockSpec(shape, lambda i: (0, 0),
                                    pipeline_mode=pl.Buffered(1))
            return pl.BlockSpec(shape, lambda i: (0, 0))

        batched = lambda shape: pl.BlockSpec(shape, lambda i: (i, 0))

        return pl.pallas_call(
            _soft_intervention_kernel,
            out_shape=jax.ShapeDtypeStruct((B, Op), f32),
            grid=(nb,),
            in_specs=[
                batched((tm, Dp)),     # x        (bf16)
                batched((tm, Dp)),     # do_mask  (int8)
                batched((tm, Dp)),     # do_values(bf16)
                resident((1, Dp)),     # alpha_raw
                resident((Dp, Hp)),    # W1 (bf16)
                resident((1, Hp)),     # b1
                resident((Hp, Op)),    # W2 (bf16)
                resident((1, Op)),     # b2
            ],
            out_specs=batched((tm, Op)),
            compiler_params=pltpu.CompilerParams(
                dimension_semantics=("parallel",),
                vmem_limit_bytes=vmem_limit,
            ),
            cost_estimate=cost,
        )

    args = (xf, mi8, dvf, af, w1p, b1p, w2p, b2p)
    try:
        out_p = _call(True)(*args)
    except Exception:
        # pipeline_mode=pl.Buffered(1) unsupported on this jax/libtpu combo:
        # fall back to default (double-buffered) resident operands.
        out_p = _call(False)(*args)

    return out_p if Op == Dout else out_p[:, :Dout]


def reference_forward(x, do_mask, do_values, alpha_raw, w1, b1, w2, b2):
    """Pure-JAX f32 reference matching the PyTorch module semantics."""
    alpha = jax.nn.sigmoid(alpha_raw)                      # (1, Din)
    soft = (1.0 - alpha) * x + alpha * do_values
    intervened = jnp.where(do_mask != 0, soft, x)
    hidden = jnp.maximum(intervened @ w1 + b1, 0.0)
    return hidden @ w2 + b2


if __name__ == "__main__":
    # Small shapes consistent with the module: MLP path (hidden_dim not None).
    B, Din, H, Dout = 8, 16, 32, 8

    key = jax.random.PRNGKey(0)
    k_x, k_dv, k_m, k_w1, k_w2 = jax.random.split(key, 5)

    x = jax.random.normal(k_x, (B, Din), dtype=jnp.float32)
    do_values = jax.random.normal(k_dv, (B, Din), dtype=jnp.float32)
    do_mask = (jax.random.uniform(k_m, (B, Din)) > 0.5).astype(jnp.float32)

    # Parameter init matching __init__ (randn * 0.1, zeros, alpha = 0.5).
    w1 = 0.1 * jax.random.normal(k_w1, (Din, H), dtype=jnp.float32)
    b1 = jnp.zeros((1, H), dtype=jnp.float32)
    w2 = 0.1 * jax.random.normal(k_w2, (H, Dout), dtype=jnp.float32)
    b2 = jnp.zeros((1, Dout), dtype=jnp.float32)
    alpha_raw = jnp.full((1, Din), 0.5, dtype=jnp.float32)

    out = soft_intervention_forward(x, do_mask, do_values, alpha_raw,
                                    w1, b1, w2, b2)
    out = jax.block_until_ready(out)

    ref = reference_forward(x, do_mask, do_values, alpha_raw, w1, b1, w2, b2)
    assert out.shape == (B, Dout)
    # bf16 streams + bf16 MXU operands -> loosened tolerance vs f32 reference.
    assert jnp.allclose(out, ref, atol=2e-2, rtol=2e-2), "mismatch vs reference"

    # TODO(synk): intervention_history / last_interventions bookkeeping and the
    # structure-learning adjacency (unused in forward) are Python-side state
    # with no kernel equivalent; omitted.
    print("KERNEL_OK")
</pallas_src>

<mosaic_0001>
module attributes {stable_mosaic.version = 11 : i64} {
  func.func @_soft_intervention_kernel(%arg0: i32, %arg1: memref<8x128xbf16, #tpu.memory_space<vmem>>, %arg2: memref<8x128xi8, #tpu.memory_space<vmem>>, %arg3: memref<8x128xbf16, #tpu.memory_space<vmem>>, %arg4: memref<1x128xf32, #tpu.memory_space<vmem>>, %arg5: memref<128x128xbf16, #tpu.memory_space<vmem>>, %arg6: memref<1x128xf32, #tpu.memory_space<vmem>>, %arg7: memref<128x128xbf16, #tpu.memory_space<vmem>>, %arg8: memref<1x128xf32, #tpu.memory_space<vmem>>, %arg9: memref<8x128xf32, #tpu.memory_space<vmem>>) attributes {dimension_semantics = [#tpu.dimension_semantics<parallel>], iteration_bounds = array<i64: 1>, scalar_prefetch = 0 : i64, scratch_operands = 0 : i64, tpu.core_type = #tpu.core_type<tc>, window_params = [{transform_indices = @transform_0, window_bounds = array<i64: 8, 128>}, {transform_indices = @transform_1, window_bounds = array<i64: 8, 128>}, {transform_indices = @transform_2, window_bounds = array<i64: 8, 128>}, {pipeline_mode = #tpu.pipeline_mode<synchronous>, transform_indices = @transform_3, window_bounds = array<i64: 1, 128>}, {pipeline_mode = #tpu.pipeline_mode<synchronous>, transform_indices = @transform_4, window_bounds = array<i64: 128, 128>}, {pipeline_mode = #tpu.pipeline_mode<synchronous>, transform_indices = @transform_5, window_bounds = array<i64: 1, 128>}, {pipeline_mode = #tpu.pipeline_mode<synchronous>, transform_indices = @transform_6, window_bounds = array<i64: 128, 128>}, {pipeline_mode = #tpu.pipeline_mode<synchronous>, transform_indices = @transform_7, window_bounds = array<i64: 1, 128>}, {transform_indices = @transform_8, window_bounds = array<i64: 8, 128>}]} {
    %c0 = arith.constant 0 : index
    %c0_0 = arith.constant 0 : index
    %0 = vector.load %arg1[%c0, %c0_0] : memref<8x128xbf16, #tpu.memory_space<vmem>>, vector<8x128xbf16>
    %1 = arith.extf %0 : vector<8x128xbf16> to vector<8x128xf32>
    %c0_1 = arith.constant 0 : index
    %c0_2 = arith.constant 0 : index
    %2 = vector.load %arg3[%c0_1, %c0_2] : memref<8x128xbf16, #tpu.memory_space<vmem>>, vector<8x128xbf16>
    %3 = arith.extf %2 : vector<8x128xbf16> to vector<8x128xf32>
    %c0_3 = arith.constant 0 : index
    %c0_4 = arith.constant 0 : index
    %4 = vector.load %arg2[%c0_3, %c0_4] : memref<8x128xi8, #tpu.memory_space<vmem>>, vector<8x128xi8>
    %5 = arith.sitofp %4 : vector<8x128xi8> to vector<8x128xf32>
    %c0_5 = arith.constant 0 : index
    %c0_6 = arith.constant 0 : index
    %6 = vector.load %arg4[%c0_5, %c0_6] : memref<1x128xf32, #tpu.memory_space<vmem>>, vector<1x128xf32>
    %7 = arith.negf %6 : vector<1x128xf32>
    %8 = math.exp %7 : vector<1x128xf32>
    %cst = arith.constant 1.000000e+00 : f32
    %9 = vector.broadcast %cst : f32 to vector<1x128xf32>
    %10 = arith.addf %9, %8 : vector<1x128xf32>
    %11 = arith.divf %9, %10 : vector<1x128xf32>
    %12 = arith.subf %3, %1 : vector<8x128xf32>
    %13 = vector.broadcast %11 : vector<1x128xf32> to vector<8x128xf32>
    %14 = arith.mulf %13, %12 : vector<8x128xf32>
    %15 = arith.mulf %5, %14 : vector<8x128xf32>
    %16 = arith.addf %1, %15 : vector<8x128xf32>
    %17 = arith.truncf %16 : vector<8x128xf32> to vector<8x128xbf16>
    %c0_7 = arith.constant 0 : index
    %c0_8 = arith.constant 0 : index
    %18 = vector.load %arg5[%c0_7, %c0_8] : memref<128x128xbf16, #tpu.memory_space<vmem>>, vector<128x128xbf16>
    %cst_9 = arith.constant dense<0.000000e+00> : vector<8x128xf32>
    %19 = tpu.matmul %17, %18, %cst_9 {dimension_numbers = #tpu.dot_dimension_numbers<[1], [0], [0], [1], [0, 0, 1, 1], [], []>} : vector<8x128xbf16>, vector<128x128xbf16>, vector<8x128xf32> -> vector<8x128xf32>
    %c0_10 = arith.constant 0 : index
    %c0_11 = arith.constant 0 : index
    %20 = vector.load %arg6[%c0_10, %c0_11] : memref<1x128xf32, #tpu.memory_space<vmem>>, vector<1x128xf32>
    %21 = vector.broadcast %20 : vector<1x128xf32> to vector<8x128xf32>
    %22 = arith.addf %19, %21 : vector<8x128xf32>
    %cst_12 = arith.constant 0.000000e+00 : f32
    %23 = vector.broadcast %cst_12 : f32 to vector<8x128xf32>
    %24 = arith.maximumf %22, %23 : vector<8x128xf32>
    %25 = arith.truncf %24 : vector<8x128xf32> to vector<8x128xbf16>
    %c0_13 = arith.constant 0 : index
    %c0_14 = arith.constant 0 : index
    %26 = vector.load %arg7[%c0_13, %c0_14] : memref<128x128xbf16, #tpu.memory_space<vmem>>, vector<128x128xbf16>
    %cst_15 = arith.constant dense<0.000000e+00> : vector<8x128xf32>
    %27 = tpu.matmul %25, %26, %cst_15 {dimension_numbers = #tpu.dot_dimension_numbers<[1], [0], [0], [1], [0, 0, 1, 1], [], []>} : vector<8x128xbf16>, vector<128x128xbf16>, vector<8x128xf32> -> vector<8x128xf32>
    %c0_16 = arith.constant 0 : index
    %c0_17 = arith.constant 0 : index
    %28 = vector.load %arg8[%c0_16, %c0_17] : memref<1x128xf32, #tpu.memory_space<vmem>>, vector<1x128xf32>
    %29 = vector.broadcast %28 : vector<1x128xf32> to vector<8x128xf32>
    %30 = arith.addf %27, %29 : vector<8x128xf32>
    %c0_18 = arith.constant 0 : index
    %c0_19 = arith.constant 0 : index
    %31 = vector.load %arg9[%c0_18, %c0_19] : memref<8x128xf32, #tpu.memory_space<vmem>>, vector<8x128xf32>
    tpu.vector_store %arg9[%c0_18, %c0_19], %30 {strides = array<i32>} : memref<8x128xf32, #tpu.memory_space<vmem>>, vector<8x128xf32>,
    return
  }
  func.func @transform_0(%arg0: i32) -> (i32, i32) {
    %c0_i32 = arith.constant 0 : i32
    %c0_i32_0 = arith.constant 0 : i32
    return %arg0, %c0_i32 : i32, i32
  }
  func.func @transform_1(%arg0: i32) -> (i32, i32) {
    %c0_i32 = arith.constant 0 : i32
    %c0_i32_0 = arith.constant 0 : i32
    return %arg0, %c0_i32 : i32, i32
  }
  func.func @transform_2(%arg0: i32) -> (i32, i32) {
    %c0_i32 = arith.constant 0 : i32
    %c0_i32_0 = arith.constant 0 : i32
    return %arg0, %c0_i32 : i32, i32
  }
  func.func @transform_3(%arg0: i32) -> (i32, i32) {
    %c0_i32 = arith.constant 0 : i32
    %c0_i32_0 = arith.constant 0 : i32
    %c0_i32_1 = arith.constant 0 : i32
    return %c0_i32, %c0_i32_0 : i32, i32
  }
  func.func @transform_4(%arg0: i32) -> (i32, i32) {
    %c0_i32 = arith.constant 0 : i32
    %c0_i32_0 = arith.constant 0 : i32
    %c0_i32_1 = arith.constant 0 : i32
    return %c0_i32, %c0_i32_0 : i32, i32
  }
  func.func @transform_5(%arg0: i32) -> (i32, i32) {
    %c0_i32 = arith.constant 0 : i32
    %c0_i32_0 = arith.constant 0 : i32
    %c0_i32_1 = arith.constant 0 : i32
    return %c0_i32, %c0_i32_0 : i32, i32
  }
  func.func @transform_6(%arg0: i32) -> (i32, i32) {
    %c0_i32 = arith.constant 0 : i32
    %c0_i32_0 = arith.constant 0 : i32
    %c0_i32_1 = arith.constant 0 : i32
    return %c0_i32, %c0_i32_0 : i32, i32
  }
  func.func @transform_7(%arg0: i32) -> (i32, i32) {
    %c0_i32 = arith.constant 0 : i32
    %c0_i32_0 = arith.constant 0 : i32
    %c0_i32_1 = arith.constant 0 : i32
    return %c0_i32, %c0_i32_0 : i32, i32
  }
  func.func @transform_8(%arg0: i32) -> (i32, i32) {
    %c0_i32 = arith.constant 0 : i32
    %c0_i32_0 = arith.constant 0 : i32
    return %arg0, %c0_i32 : i32, i32
  }
}

module attributes {stable_mosaic.version = 11 : i64} {
  func.func @_soft_intervention_kernel(%arg0: i32, %arg1: memref<8x128xbf16, #tpu.memory_space<vmem>>, %arg2: memref<8x128xi8, #tpu.memory_space<vmem>>, %arg3: memref<8x128xbf16, #tpu.memory_space<vmem>>, %arg4: memref<1x128xf32, #tpu.memory_space<vmem>>, %arg5: memref<128x128xbf16, #tpu.memory_space<vmem>>, %arg6: memref<1x128xf32, #tpu.memory_space<vmem>>, %arg7: memref<128x128xbf16, #tpu.memory_space<vmem>>, %arg8: memref<1x128xf32, #tpu.memory_space<vmem>>, %arg9: memref<8x128xf32, #tpu.memory_space<vmem>>) attributes {dimension_semantics = [#tpu.dimension_semantics<parallel>], iteration_bounds = array<i64: 1>, scalar_prefetch = 0 : i64, scratch_operands = 0 : i64, tpu.core_type = #tpu.core_type<tc>, window_params = [{transform_indices = @transform_0, window_bounds = array<i64: 8, 128>}, {transform_indices = @transform_1, window_bounds = array<i64: 8, 128>}, {transform_indices = @transform_2, window_bounds = array<i64: 8, 128>}, {pipeline_mode = #tpu.pipeline_mode<synchronous>, transform_indices = @transform_3, window_bounds = array<i64: 1, 128>}, {pipeline_mode = #tpu.pipeline_mode<synchronous>, transform_indices = @transform_4, window_bounds = array<i64: 128, 128>}, {pipeline_mode = #tpu.pipeline_mode<synchronous>, transform_indices = @transform_5, window_bounds = array<i64: 1, 128>}, {pipeline_mode = #tpu.pipeline_mode<synchronous>, transform_indices = @transform_6, window_bounds = array<i64: 128, 128>}, {pipeline_mode = #tpu.pipeline_mode<synchronous>, transform_indices = @transform_7, window_bounds = array<i64: 1, 128>}, {transform_indices = @transform_8, window_bounds = array<i64: 8, 128>}]} {
    %c0 = arith.constant 0 : index
    %c0_0 = arith.constant 0 : index
    %0 = vector.load %arg1[%c0, %c0_0] : memref<8x128xbf16, #tpu.memory_space<vmem>>, vector<8x128xbf16>
    %1 = arith.extf %0 : vector<8x128xbf16> to vector<8x128xf32>
    %c0_1 = arith.constant 0 : index
    %c0_2 = arith.constant 0 : index
    %2 = vector.load %arg3[%c0_1, %c0_2] : memref<8x128xbf16, #tpu.memory_space<vmem>>, vector<8x128xbf16>
    %3 = arith.extf %2 : vector<8x128xbf16> to vector<8x128xf32>
    %c0_3 = arith.constant 0 : index
    %c0_4 = arith.constant 0 : index
    %4 = vector.load %arg2[%c0_3, %c0_4] : memref<8x128xi8, #tpu.memory_space<vmem>>, vector<8x128xi8>
    %5 = arith.sitofp %4 : vector<8x128xi8> to vector<8x128xf32>
    %c0_5 = arith.constant 0 : index
    %c0_6 = arith.constant 0 : index
    %6 = vector.load %arg4[%c0_5, %c0_6] : memref<1x128xf32, #tpu.memory_space<vmem>>, vector<1x128xf32>
    %7 = arith.negf %6 : vector<1x128xf32>
    %8 = math.exp %7 : vector<1x128xf32>
    %cst = arith.constant 1.000000e+00 : f32
    %9 = vector.broadcast %cst : f32 to vector<1x128xf32>
    %10 = arith.addf %9, %8 : vector<1x128xf32>
    %11 = arith.divf %9, %10 : vector<1x128xf32>
    %12 = arith.subf %3, %1 : vector<8x128xf32>
    %13 = vector.broadcast %11 : vector<1x128xf32> to vector<8x128xf32>
    %14 = arith.mulf %13, %12 : vector<8x128xf32>
    %15 = arith.mulf %5, %14 : vector<8x128xf32>
    %16 = arith.addf %1, %15 : vector<8x128xf32>
    %17 = arith.truncf %16 : vector<8x128xf32> to vector<8x128xbf16>
    %c0_7 = arith.constant 0 : index
    %c0_8 = arith.constant 0 : index
    %18 = vector.load %arg5[%c0_7, %c0_8] : memref<128x128xbf16, #tpu.memory_space<vmem>>, vector<128x128xbf16>
    %cst_9 = arith.constant dense<0.000000e+00> : vector<8x128xf32>
    %19 = tpu.matmul %17, %18, %cst_9 {dimension_numbers = #tpu.dot_dimension_numbers<[1], [0], [0], [1], [0, 0, 1, 1], [], []>} : vector<8x128xbf16>, vector<128x128xbf16>, vector<8x128xf32> -> vector<8x128xf32>
    %c0_10 = arith.constant 0 : index
    %c0_11 = arith.constant 0 : index
    %20 = vector.load %arg6[%c0_10, %c0_11] : memref<1x128xf32, #tpu.memory_space<vmem>>, vector<1x128xf32>
    %21 = vector.broadcast %20 : vector<1x128xf32> to vector<8x128xf32>
    %22 = arith.addf %19, %21 : vector<8x128xf32>
    %cst_12 = arith.constant 0.000000e+00 : f32
    %23 = vector.broadcast %cst_12 : f32 to vector<8x128xf32>
    %24 = arith.maximumf %22, %23 : vector<8x128xf32>
    %25 = arith.truncf %24 : vector<8x128xf32> to vector<8x128xbf16>
    %c0_13 = arith.constant 0 : index
    %c0_14 = arith.constant 0 : index
    %26 = vector.load %arg7[%c0_13, %c0_14] : memref<128x128xbf16, #tpu.memory_space<vmem>>, vector<128x128xbf16>
    %cst_15 = arith.constant dense<0.000000e+00> : vector<8x128xf32>
    %27 = tpu.matmul %25, %26, %cst_15 {dimension_numbers = #tpu.dot_dimension_numbers<[1], [0], [0], [1], [0, 0, 1, 1], [], []>} : vector<8x128xbf16>, vector<128x128xbf16>, vector<8x128xf32> -> vector<8x128xf32>
    %c0_16 = arith.constant 0 : index
    %c0_17 = arith.constant 0 : index
    %28 = vector.load %arg8[%c0_16, %c0_17] : memref<1x128xf32, #tpu.memory_space<vmem>>, vector<1x128xf32>
    %29 = vector.broadcast %28 : vector<1x128xf32> to vector<8x128xf32>
    %30 = arith.addf %27, %29 : vector<8x128xf32>
    %c0_18 = arith.constant 0 : index
    %c0_19 = arith.constant 0 : index
    %31 = vector.load %arg9[%c0_18, %c0_19] : memref<8x128xf32, #tpu.memory_space<vmem>>, vector<8x128xf32>
    tpu.vector_store %arg9[%c0_18, %c0_19], %30 {strides = array<i32>} : memref<8x128xf32, #tpu.memory_space<vmem>>, vector<8x128xf32>,
    return
  }
  func.func @transform_0(%arg0: i32) -> (i32, i32) {
    %c0_i32 = arith.constant 0 : i32
    %c0_i32_0 = arith.constant 0 : i32
    return %arg0, %c0_i32 : i32, i32
  }
  func.func @transform_1(%arg0: i32) -> (i32, i32) {
    %c0_i32 = arith.constant 0 : i32
    %c0_i32_0 = arith.constant 0 : i32
    return %arg0, %c0_i32 : i32, i32
  }
  func.func @transform_2(%arg0: i32) -> (i32, i32) {
    %c0_i32 = arith.constant 0 : i32
    %c0_i32_0 = arith.constant 0 : i32
    return %arg0, %c0_i32 : i32, i32
  }
  func.func @transform_3(%arg0: i32) -> (i32, i32) {
    %c0_i32 = arith.constant 0 : i32
    %c0_i32_0 = arith.constant 0 : i32
    %c0_i32_1 = arith.constant 0 : i32
    return %c0_i32, %c0_i32_0 : i32, i32
  }
  func.func @transform_4(%arg0: i32) -> (i32, i32) {
    %c0_i32 = arith.constant 0 : i32
    %c0_i32_0 = arith.constant 0 : i32
    %c0_i32_1 = arith.constant 0 : i32
    return %c0_i32, %c0_i32_0 : i32, i32
  }
  func.func @transform_5(%arg0: i32) -> (i32, i32) {
    %c0_i32 = arith.constant 0 : i32
    %c0_i32_0 = arith.constant 0 : i32
    %c0_i32_1 = arith.constant 0 : i32
    return %c0_i32, %c0_i32_0 : i32, i32
  }
  func.func @transform_6(%arg0: i32) -> (i32, i32) {
    %c0_i32 = arith.constant 0 : i32
    %c0_i32_0 = arith.constant 0 : i32
    %c0_i32_1 = arith.constant 0 : i32
    return %c0_i32, %c0_i32_0 : i32, i32
  }
  func.func @transform_7(%arg0: i32) -> (i32, i32) {
    %c0_i32 = arith.constant 0 : i32
    %c0_i32_0 = arith.constant 0 : i32
    %c0_i32_1 = arith.constant 0 : i32
    return %c0_i32, %c0_i32_0 : i32, i32
  }
  func.func @transform_8(%arg0: i32) -> (i32, i32) {
    %c0_i32 = arith.constant 0 : i32
    %c0_i32_0 = arith.constant 0 : i32
    return %arg0, %c0_i32 : i32, i32
  }
}

</mosaic_0001>

<llo_original>
// kernel: tpu_custom_call.1
$region0: #{tpu_custom_call.1}
  #allocation0 [shape = 'u32[]', space=smem, size = 0x4, offset = 0x4, fixed_abs, tag = 'smem constant byte address 0x4 - core index']
  #allocation1 [shape = 'u32[144,128]{1,0:T(1,128)}', space=vmem, size = 0x12000, scoped, tag = 'internal scratch']
  %s0 = inlined_call_operand.hbm [shape: bf16[8,128], index: 0, kind: input, shape index: {}]
  %s1 = inlined_call_operand.hbm [shape: s8[8,128], index: 1, kind: input, shape index: {}]
  %s2 = inlined_call_operand.hbm [shape: bf16[8,128], index: 2, kind: input, shape index: {}]
  %s3 = inlined_call_operand.vmem [shape: f32[1,128], index: 3, kind: input, shape index: {}]
  %s4 = inlined_call_operand.hbm [shape: bf16[128,128], index: 4, kind: input, shape index: {}]
  %s5 = inlined_call_operand.vmem [shape: f32[1,128], index: 5, kind: input, shape index: {}]
  %s6 = inlined_call_operand.hbm [shape: bf16[128,128], index: 6, kind: input, shape index: {}]
  %s7 = inlined_call_operand.vmem [shape: f32[1,128], index: 7, kind: input, shape index: {}]
  %s8 = inlined_call_operand.hbm [shape: f32[8,128], index: 8, kind: output, shape index: {}]
  %s9 = sld [smem:[#allocation0]]
  $region62: #{tpu_custom_call.1} parent=0
    _
  %s11 = ssub.s32 1, %s9
  %s12 = scalar_select 0, %s11, %s9
  $region1: #{tpu_custom_call.1} parent=0
    #allocation2 [shape = 'u8[2048]{0}', space=vmem, size = 0x800, scoped, tag = 'input window, operand 0, single buffered']
    #allocation3 [shape = 's32[1]{0}', space=sflag, size = 0x4, scoped, tag = 'scoped memory for tpu_custom_call.1']
    #allocation4 [shape = 's32[1]{0}', space=sflag, size = 0x4, scoped, tag = 'scoped memory for tpu_custom_call.1']
    #allocation5 [shape = 'u8[1024]{0}', space=vmem, size = 0x400, scoped, tag = 'input window, operand 1, single buffered']
    #allocation6 [shape = 's32[1]{0}', space=sflag, size = 0x4, scoped, tag = 'scoped memory for tpu_custom_call.1']
    #allocation7 [shape = 'u8[2048]{0}', space=vmem, size = 0x800, scoped, tag = 'input window, operand 2, single buffered']
    #allocation8 [shape = 'u8[32768]{0}', space=vmem, size = 0x8000, scoped, tag = 'input window, operand 4, single buffered']
    #allocation9 [shape = 's32[1]{0}', space=sflag, size = 0x4, scoped, tag = 'scoped memory for tpu_custom_call.1']
    #allocation10 [shape = 'u8[32768]{0}', space=vmem, size = 0x8000, scoped, tag = 'input window, operand 6, single buffered']
    #allocation11 [shape = 'u8[4096]{0}', space=vmem, size = 0x1000, scoped, tag = 'output window, operand 0, single buffered']
    %13 = vsyncpa [#allocation3], 0
    %14 = vsyncpa [#allocation6], 0
    %15 = vsyncpa [#allocation9], 0
    %16 = vsyncpa [#allocation4], 0
    // Predicated region
    $region2: #{tpu_custom_call.1} parent=1 // pred_check
      _
    $region3: #{tpu_custom_call.1} parent=1 // pred_check_branch
      %18 = sbr.rel (0) target = $region5
    $region4: #{tpu_custom_call.1} parent=1 // pred_region
      %s20 = ssub.s32 64, 64
      %21 = vsyncadd [#allocation3], %s20
      %s23 = sshll.u32 [#allocation2], 4
      %s24 = int_to_ptr.vmem [resolvable:$true] %s23
      %26 = dma.hbm_to_vmem [thread:$0]  %s0, 64, %s24, [#allocation3]
    $region5: #{tpu_custom_call.1} parent=1 // pred_fallthru
      _
    // Predicated region
    $region6: #{tpu_custom_call.1} parent=1 // pred_check
      _
    $region7: #{tpu_custom_call.1} parent=1 // pred_check_branch
      %28 = sbr.rel (0) target = $region9
    $region8: #{tpu_custom_call.1} parent=1 // pred_region
      %s30 = ssub.s32 32, 32
      %31 = vsyncadd [#allocation6], %s30
      %s33 = sshll.u32 [#allocation5], 4
      %s34 = int_to_ptr.vmem [resolvable:$true] %s33
      %36 = dma.hbm_to_vmem [thread:$0]  %s1, 32, %s34, [#allocation6]
    $region9: #{tpu_custom_call.1} parent=1 // pred_fallthru
      _
    // Predicated region
    $region10: #{tpu_custom_call.1} parent=1 // pred_check
      _
    $region11: #{tpu_custom_call.1} parent=1 // pred_check_branch
      %38 = sbr.rel (0) target = $region13
    $region12: #{tpu_custom_call.1} parent=1 // pred_region
      %s40 = ssub.s32 64, 64
      %41 = vsyncadd [#allocation6], %s40
      %s43 = sshll.u32 [#allocation7], 4
      %s44 = int_to_ptr.vmem [resolvable:$true] %s43
      %46 = dma.hbm_to_vmem [thread:$0]  %s2, 64, %s44, [#allocation6]
    $region13: #{tpu_custom_call.1} parent=1 // pred_fallthru
      _
    // Predicated region
    $region14: #{tpu_custom_call.1} parent=1 // pred_check
      _
    $region15: #{tpu_custom_call.1} parent=1 // pred_check_branch
      %48 = sbr.rel (0) target = $region17
    $region16: #{tpu_custom_call.1} parent=1 // pred_region
      _
    $region17: #{tpu_custom_call.1} parent=1 // pred_fallthru
      _
    // Predicated region
    $region18: #{tpu_custom_call.1} parent=1 // pred_check
      _
    $region19: #{tpu_custom_call.1} parent=1 // pred_check_branch
      %50 = sbr.rel (0) target = $region21
    $region20: #{tpu_custom_call.1} parent=1 // pred_region
      %s52 = ssub.s32 1024, 1024
      %53 = vsyncadd [#allocation9], %s52
      %s54 = sshll.u32 [#allocation8], 4
      %s55 = int_to_ptr.vmem [resolvable:$true] %s54
      %60 = dma.hbm_to_vmem [thread:$0]  %s4, 1024, %s55, [#allocation9], 64, 64, 4
    $region21: #{tpu_custom_call.1} parent=1 // pred_fallthru
      _
    // Predicated region
    $region22: #{tpu_custom_call.1} parent=1 // pred_check
      _
    $region23: #{tpu_custom_call.1} parent=1 // pred_check_branch
      %62 = sbr.rel (0) target = $region25
    $region24: #{tpu_custom_call.1} parent=1 // pred_region
      _
    $region25: #{tpu_custom_call.1} parent=1 // pred_fallthru
      _
    // Predicated region
    $region26: #{tpu_custom_call.1} parent=1 // pred_check
      _
    $region27: #{tpu_custom_call.1} parent=1 // pred_check_branch
      %64 = sbr.rel (0) target = $region29
    $region28: #{tpu_custom_call.1} parent=1 // pred_region
      %s66 = ssub.s32 1024, 1024
      %67 = vsyncadd [#allocation9], %s66
      %s68 = sshll.u32 [#allocation10], 4
      %s69 = int_to_ptr.vmem [resolvable:$true] %s68
      %74 = dma.hbm_to_vmem [thread:$0]  %s6, 1024, %s69, [#allocation9], 64, 64, 4
    $region29: #{tpu_custom_call.1} parent=1 // pred_fallthru
      _
    // Predicated region
    $region30: #{tpu_custom_call.1} parent=1 // pred_check
      _
    $region31: #{tpu_custom_call.1} parent=1 // pred_check_branch
      %76 = sbr.rel (0) target = $region33
    $region32: #{tpu_custom_call.1} parent=1 // pred_region
      _
    $region33: #{tpu_custom_call.1} parent=1 // pred_fallthru
      _
    // Predicated region
    $region34: #{tpu_custom_call.1} parent=1 // pred_check
      _
    $region35: #{tpu_custom_call.1} parent=1 // pred_check_branch
      %78 = sbr.rel (0) target = $region37
    $region36: #{tpu_custom_call.1} parent=1 // pred_region
      %79 = dma.done [#allocation3], 64
    $region37: #{tpu_custom_call.1} parent=1 // pred_fallthru
      _
    // Predicated region
    $region38: #{tpu_custom_call.1} parent=1 // pred_check
      _
    $region39: #{tpu_custom_call.1} parent=1 // pred_check_branch
      %81 = sbr.rel (0) target = $region41
    $region40: #{tpu_custom_call.1} parent=1 // pred_region
      %82 = dma.done [#allocation6], 32
    $region41: #{tpu_custom_call.1} parent=1 // pred_fallthru
      _
    // Predicated region
    $region42: #{tpu_custom_call.1} parent=1 // pred_check
      _
    $region43: #{tpu_custom_call.1} parent=1 // pred_check_branch
      %84 = sbr.rel (0) target = $region45
    $region44: #{tpu_custom_call.1} parent=1 // pred_region
      %85 = dma.done [#allocation6], 64
    $region45: #{tpu_custom_call.1} parent=1 // pred_fallthru
      _
    // Predicated region
    $region46: #{tpu_custom_call.1} parent=1 // pred_check
      _
    $region47: #{tpu_custom_call.1} parent=1 // pred_check_branch
      %87 = sbr.rel (0) target = $region49
    $region48: #{tpu_custom_call.1} parent=1 // pred_region
      %88 = dma.done [#allocation9], 1024
    $region49: #{tpu_custom_call.1} parent=1 // pred_fallthru
      _
    // Predicated region
    $region50: #{tpu_custom_call.1} parent=1 // pred_check
      _
    $region51: #{tpu_custom_call.1} parent=1 // pred_check_branch
      %90 = sbr.rel (0) target = $region53
    $region52: #{tpu_custom_call.1} parent=1 // pred_region
      %91 = dma.done [#allocation9], 1024
    $region53: #{tpu_custom_call.1} parent=1 // pred_fallthru
      _
    %v93 = vld [vmem:[#allocation2] sm:$0xf]
    %v94 = vunpack.c.l.bf16 %v93
    %v95 = vld [vmem:[#allocation7] sm:$0xf]
    %v96 = vunpack.c.l.bf16 %v95
    %v97 = vld [vmem:[#allocation5] sm:$0x3]
    %v98 = vunpack.c.0.s8 %v97
    %v99 = vcvt.s32.f32 %v98
    %v100 = vld [vmem:[%s3] sm:$0x1]
    %v101 = vxor.u32 %v100, 2147483648
    %v102 = vmul.f32 %v101, 1.442695
    %v103 = vpow.pop %v102
    %v104 = vadd.f32 %v103, 1.0
    %v105 = vrcp.pop %v104
    %v106 = vmul.f32 1.0, %v105
    %v107 = vsub.f32 %v96, %v94
    %v109 = vlaneseq
    %v110 = vshrl.u32 %v109, 7
    %v111 = vsub.s32 0, %v110
    %v112 = vrot.slane %v106, %v111
    %v114 = vmul.f32 %v112, %v107
    %v115 = vmul.f32 %v99, %v114
    %v116 = vadd.f32 %v94, %v115
    %v117 = vpack.c.bf16 %v116, %v116
    %v118 = vld [vmem:[#allocation8] sm:$0xf]
    %v119 = vld [vmem:[#allocation8 + $0x4] sm:$0xf]
    %v120 = vld [vmem:[#allocation8 + $0x8] sm:$0xf]
    %v121 = vld [vmem:[#allocation8 + $0xc] sm:$0xf]
    %v122 = vld [vmem:[#allocation8 + $0x10] sm:$0xf]
    %v123 = vld [vmem:[#allocation8 + $0x14] sm:$0xf]
    %v124 = vld [vmem:[#allocation8 + $0x18] sm:$0xf]
    %v125 = vld [vmem:[#allocation8 + $0x1c] sm:$0xf]
    %v126 = vld [vmem:[#allocation8 + $0x20] sm:$0xf]
    %v127 = vld [vmem:[#allocation8 + $0x24] sm:$0xf]
    %v128 = vld [vmem:[#allocation8 + $0x28] sm:$0xf]
    %v129 = vld [vmem:[#allocation8 + $0x2c] sm:$0xf]
    %v130 = vld [vmem:[#allocation8 + $0x30] sm:$0xf]
    %v131 = vld [vmem:[#allocation8 + $0x34] sm:$0xf]
    %v132 = vld [vmem:[#allocation8 + $0x38] sm:$0xf]
    %v133 = vld [vmem:[#allocation8 + $0x3c] sm:$0xf]
    %v134 = vld [vmem:[%s5] sm:$0x1]
    %v136 = vlaneseq
    %v137 = vshrl.u32 %v136, 7
    %v138 = vsub.s32 0, %v137
    %v139 = vrot.slane %v134, %v138
    %v157 = vunpack.c.l.b16 %v118
    %v158 = vunpack.c.l.b16 %v119
    %v159 = vunpack.c.l.b16 %v120
    %v160 = vunpack.c.l.b16 %v121
    %v161 = vunpack.c.l.b16 %v122
    %v162 = vunpack.c.l.b16 %v123
    %v163 = vunpack.c.l.b16 %v124
    %v164 = vunpack.c.l.b16 %v125
    %v165 = vunpack.c.l.b16 %v126
    %v166 = vunpack.c.l.b16 %v127
    %v167 = vunpack.c.l.b16 %v128
    %v168 = vunpack.c.l.b16 %v129
    %v169 = vunpack.c.l.b16 %v130
    %v170 = vunpack.c.l.b16 %v131
    %v171 = vunpack.c.l.b16 %v132
    %v172 = vunpack.c.l.b16 %v133
    %v173 = vpack.c.b16 %v158, %v157
    %v174 = vpack.c.b16 %v160, %v159
    %v175 = vpack.c.b16 %v162, %v161
    %v176 = vpack.c.b16 %v164, %v163
    %v177 = vpack.c.b16 %v166, %v165
    %v178 = vpack.c.b16 %v168, %v167
    %v179 = vpack.c.b16 %v170, %v169
    %v180 = vpack.c.b16 %v172, %v171
    %189 = vmatprep.subr.bf16.mxu0 0
    %190 = vmatpush1.bf16.msra.mxu0 %v180
    %191 = vmatprep.subr.bf16.mxu0 0
    %192 = vmatpush1.bf16.msra.mxu0 %v179
    %193 = vmatprep.subr.bf16.mxu0 0
    %194 = vmatpush1.bf16.msra.mxu0 %v178
    %195 = vmatprep.subr.bf16.mxu0 0
    %196 = vmatpush1.bf16.msra.mxu0 %v177
    %197 = vmatprep.subr.bf16.mxu0 0
    %198 = vmatpush1.bf16.msra.mxu0 %v176
    %199 = vmatprep.subr.bf16.mxu0 0
    %200 = vmatpush1.bf16.msra.mxu0 %v175
    %201 = vmatprep.subr.bf16.mxu0 0
    %202 = vmatpush1.bf16.msra.mxu0 %v174
    %203 = vmatprep.subr.bf16.mxu0 0
    %204 = vmatpush1.bf16.msra.mxu0 %v173
    %205 = vmatprep.subr.bf16.mxu0 0
    %206 = vmatpush2.bf16.msra.mxu0 0
    %207 = vmatprep.subr.bf16.mxu0 0
    %208 = vmatpush2.bf16.msra.mxu0 0
    %209 = vmatprep.subr.bf16.mxu0 0
    %210 = vmatpush2.bf16.msra.mxu0 0
    %211 = vmatprep.subr.bf16.mxu0 0
    %212 = vmatpush2.bf16.msra.mxu0 0
    %213 = vmatprep.subr.bf16.mxu0 0
    %214 = vmatpush2.bf16.msra.mxu0 0
    %215 = vmatprep.subr.bf16.mxu0 0
    %216 = vmatpush2.bf16.msra.mxu0 0
    %217 = vmatprep.subr.bf16.mxu0 0
    %218 = vmatpush2.bf16.msra.mxu0 0
    %219 = vmatprep.subr.bf16.mxu0 0
    %220 = vmatpush2.bf16.msra.mxu0 0
    %221 = vmatprep.mubr.bf16.mxu0 0
    %222 = vmatmul.mubr.bf16.gmra.mxu0 %v117
    %v223 = vpop.f32.mrf.mxu0
    %v224 = vadd.f32 %v139, %v223
    %v225 = vpop.f32.mrf.mxu0
    %v226 = vpop.f32.mrf.mxu0
    %v227 = vpop.f32.mrf.mxu0
    %228 = vdwg.mxu0
    %v229 = vmax.f32 %v224, 0.0
    %v230 = vpack.c.bf16 %v229, %v229
    %v231 = vld [vmem:[#allocation10] sm:$0xf]
    %v232 = vld [vmem:[#allocation10 + $0x4] sm:$0xf]
    %v233 = vld [vmem:[#allocation10 + $0x8] sm:$0xf]
    %v234 = vld [vmem:[#allocation10 + $0xc] sm:$0xf]
    %v235 = vld [vmem:[#allocation10 + $0x10] sm:$0xf]
    %v236 = vld [vmem:[#allocation10 + $0x14] sm:$0xf]
    %v237 = vld [vmem:[#allocation10 + $0x18] sm:$0xf]
    %v238 = vld [vmem:[#allocation10 + $0x1c] sm:$0xf]
    %v239 = vld [vmem:[#allocation10 + $0x20] sm:$0xf]
    %v240 = vld [vmem:[#allocation10 + $0x24] sm:$0xf]
    %v241 = vld [vmem:[#allocation10 + $0x28] sm:$0xf]
    %v242 = vld [vmem:[#allocation10 + $0x2c] sm:$0xf]
    %v243 = vld [vmem:[#allocation10 + $0x30] sm:$0xf]
    %v244 = vld [vmem:[#allocation10 + $0x34] sm:$0xf]
    %v245 = vld [vmem:[#allocation10 + $0x38] sm:$0xf]
    %v246 = vld [vmem:[#allocation10 + $0x3c] sm:$0xf]
    %v247 = vld [vmem:[%s7] sm:$0x1]
    %v249 = vlaneseq
    %v250 = vshrl.u32 %v249, 7
    %v251 = vsub.s32 0, %v250
    %v252 = vrot.slane %v247, %v251
    %v270 = vunpack.c.l.b16 %v231
    %v271 = vunpack.c.l.b16 %v232
    %v272 = vunpack.c.l.b16 %v233
    %v273 = vunpack.c.l.b16 %v234
    %v274 = vunpack.c.l.b16 %v235
    %v275 = vunpack.c.l.b16 %v236
    %v276 = vunpack.c.l.b16 %v237
    %v277 = vunpack.c.l.b16 %v238
    %v278 = vunpack.c.l.b16 %v239
    %v279 = vunpack.c.l.b16 %v240
    %v280 = vunpack.c.l.b16 %v241
    %v281 = vunpack.c.l.b16 %v242
    %v282 = vunpack.c.l.b16 %v243
    %v283 = vunpack.c.l.b16 %v244
    %v284 = vunpack.c.l.b16 %v245
    %v285 = vunpack.c.l.b16 %v246
    %v286 = vpack.c.b16 %v271, %v270
    %v287 = vpack.c.b16 %v273, %v272
    %v288 = vpack.c.b16 %v275, %v274
    %v289 = vpack.c.b16 %v277, %v276
    %v290 = vpack.c.b16 %v279, %v278
    %v291 = vpack.c.b16 %v281, %v280
    %v292 = vpack.c.b16 %v283, %v282
    %v293 = vpack.c.b16 %v285, %v284
    %302 = vmatprep.subr.bf16.mxu0 0
    %303 = vmatpush1.bf16.msra.mxu0 %v293
    %304 = vmatprep.subr.bf16.mxu0 0
    %305 = vmatpush1.bf16.msra.mxu0 %v292
    %306 = vmatprep.subr.bf16.mxu0 0
    %307 = vmatpush1.bf16.msra.mxu0 %v291
    %308 = vmatprep.subr.bf16.mxu0 0
    %309 = vmatpush1.bf16.msra.mxu0 %v290
    %310 = vmatprep.subr.bf16.mxu0 0
    %311 = vmatpush1.bf16.msra.mxu0 %v289
    %312 = vmatprep.subr.bf16.mxu0 0
    %313 = vmatpush1.bf16.msra.mxu0 %v288
    %314 = vmatprep.subr.bf16.mxu0 0
    %315 = vmatpush1.bf16.msra.mxu0 %v287
    %316 = vmatprep.subr.bf16.mxu0 0
    %317 = vmatpush1.bf16.msra.mxu0 %v286
    %318 = vmatprep.subr.bf16.mxu0 0
    %319 = vmatpush2.bf16.msra.mxu0 0
    %320 = vmatprep.subr.bf16.mxu0 0
    %321 = vmatpush2.bf16.msra.mxu0 0
    %322 = vmatprep.subr.bf16.mxu0 0
    %323 = vmatpush2.bf16.msra.mxu0 0
    %324 = vmatprep.subr.bf16.mxu0 0
    %325 = vmatpush2.bf16.msra.mxu0 0
    %326 = vmatprep.subr.bf16.mxu0 0
    %327 = vmatpush2.bf16.msra.mxu0 0
    %328 = vmatprep.subr.bf16.mxu0 0
    %329 = vmatpush2.bf16.msra.mxu0 0
    %330 = vmatprep.subr.bf16.mxu0 0
    %331 = vmatpush2.bf16.msra.mxu0 0
    %332 = vmatprep.subr.bf16.mxu0 0
    %333 = vmatpush2.bf16.msra.mxu0 0
    %334 = vmatprep.mubr.bf16.mxu0 0
    %335 = vmatmul.mubr.bf16.gmra.mxu0 %v230
    %v336 = vpop.f32.mrf.mxu0
    %v337 = vadd.f32 %v252, %v336
    %v338 = vpop.f32.mrf.mxu0
    %v339 = vpop.f32.mrf.mxu0
    %v340 = vpop.f32.mrf.mxu0
    %341 = vdwg.mxu0
    %342 = vst [vmem:[#allocation11] sm:$0xff] %v337
    // Predicated region
    $region54: #{tpu_custom_call.1} parent=1 // pred_check
      _
    $region55: #{tpu_custom_call.1} parent=1 // pred_check_branch
      %344 = sbr.rel (0) target = $region57
    $region56: #{tpu_custom_call.1} parent=1 // pred_region
      %s346 = ssub.s32 128, 128
      %347 = vsyncadd [#allocation4], %s346
      %s349 = sshll.u32 [#allocation11], 4
      %s350 = int_to_ptr.vmem [resolvable:$true] %s349
      %352 = dma.vmem_to_hbm [thread:$0]  %s350, 128, %s8, [#allocation4]
    $region57: #{tpu_custom_call.1} parent=1 // pred_fallthru
      _
    // Predicated region
    $region58: #{tpu_custom_call.1} parent=1 // pred_check
      _
    $region59: #{tpu_custom_call.1} parent=1 // pred_check_branch
      %354 = sbr.rel (0) target = $region61
    $region60: #{tpu_custom_call.1} parent=1 // pred_region
      %355 = dma.done [#allocation4], 128
    $region61: #{tpu_custom_call.1} parent=1 // pred_fallthru
      _
    %356 = vsyncpa [#allocation3], 1
    %357 = vsyncpa [#allocation6], 1
    %358 = vsyncpa [#allocation9], 1
    %359 = vsyncpa [#allocation4], 1

// kernel: tpu_custom_call.1
$region0: #{tpu_custom_call.1}
  #allocation0 [shape = 'u32[]', space=smem, size = 0x4, offset = 0x4, fixed_abs, tag = 'smem constant byte address 0x4 - core index']
  #allocation1 [shape = 'u32[144,128]{1,0:T(1,128)}', space=vmem, size = 0x12000, scoped, tag = 'internal scratch']
  %s0 = inlined_call_operand.hbm [shape: bf16[8,128], index: 0, kind: input, shape index: {}]
  %s1 = inlined_call_operand.hbm [shape: s8[8,128], index: 1, kind: input, shape index: {}]
  %s2 = inlined_call_operand.hbm [shape: bf16[8,128], index: 2, kind: input, shape index: {}]
  %s3 = inlined_call_operand.vmem [shape: f32[1,128], index: 3, kind: input, shape index: {}]
  %s4 = inlined_call_operand.hbm [shape: bf16[128,128], index: 4, kind: input, shape index: {}]
  %s5 = inlined_call_operand.vmem [shape: f32[1,128], index: 5, kind: input, shape index: {}]
  %s6 = inlined_call_operand.hbm [shape: bf16[128,128], index: 6, kind: input, shape index: {}]
  %s7 = inlined_call_operand.vmem [shape: f32[1,128], index: 7, kind: input, shape index: {}]
  %s8 = inlined_call_operand.hbm [shape: f32[8,128], index: 8, kind: output, shape index: {}]
  %s9 = sld [smem:[#allocation0]]
  $region62: #{tpu_custom_call.1} parent=0
    _
  %s11 = ssub.s32 1, %s9
  %s12 = scalar_select 0, %s11, %s9
  $region1: #{tpu_custom_call.1} parent=0
    #allocation2 [shape = 'u8[2048]{0}', space=vmem, size = 0x800, scoped, tag = 'input window, operand 0, single buffered']
    #allocation3 [shape = 's32[1]{0}', space=sflag, size = 0x4, scoped, tag = 'scoped memory for tpu_custom_call.1']
    #allocation4 [shape = 's32[1]{0}', space=sflag, size = 0x4, scoped, tag = 'scoped memory for tpu_custom_call.1']
    #allocation5 [shape = 'u8[1024]{0}', space=vmem, size = 0x400, scoped, tag = 'input window, operand 1, single buffered']
    #allocation6 [shape = 's32[1]{0}', space=sflag, size = 0x4, scoped, tag = 'scoped memory for tpu_custom_call.1']
    #allocation7 [shape = 'u8[2048]{0}', space=vmem, size = 0x800, scoped, tag = 'input window, operand 2, single buffered']
    #allocation8 [shape = 'u8[32768]{0}', space=vmem, size = 0x8000, scoped, tag = 'input window, operand 4, single buffered']
    #allocation9 [shape = 's32[1]{0}', space=sflag, size = 0x4, scoped, tag = 'scoped memory for tpu_custom_call.1']
    #allocation10 [shape = 'u8[32768]{0}', space=vmem, size = 0x8000, scoped, tag = 'input window, operand 6, single buffered']
    #allocation11 [shape = 'u8[4096]{0}', space=vmem, size = 0x1000, scoped, tag = 'output window, operand 0, single buffered']
    %13 = vsyncpa [#allocation3], 0
    %14 = vsyncpa [#allocation6], 0
    %15 = vsyncpa [#allocation9], 0
    %16 = vsyncpa [#allocation4], 0
    // Predicated region
    $region2: #{tpu_custom_call.1} parent=1 // pred_check
      _
    $region3: #{tpu_custom_call.1} parent=1 // pred_check_branch
      %18 = sbr.rel (0) target = $region5
    $region4: #{tpu_custom_call.1} parent=1 // pred_region
      %s20 = ssub.s32 64, 64
      %21 = vsyncadd [#allocation3], %s20
      %s23 = sshll.u32 [#allocation2], 4
      %s24 = int_to_ptr.vmem [resolvable:$true] %s23
      %26 = dma.hbm_to_vmem [thread:$0]  %s0, 64, %s24, [#allocation3]
    $region5: #{tpu_custom_call.1} parent=1 // pred_fallthru
      _
    // Predicated region
    $region6: #{tpu_custom_call.1} parent=1 // pred_check
      _
    $region7: #{tpu_custom_call.1} parent=1 // pred_check_branch
      %28 = sbr.rel (0) target = $region9
    $region8: #{tpu_custom_call.1} parent=1 // pred_region
      %s30 = ssub.s32 32, 32
      %31 = vsyncadd [#allocation6], %s30
      %s33 = sshll.u32 [#allocation5], 4
      %s34 = int_to_ptr.vmem [resolvable:$true] %s33
      %36 = dma.hbm_to_vmem [thread:$0]  %s1, 32, %s34, [#allocation6]
    $region9: #{tpu_custom_call.1} parent=1 // pred_fallthru
      _
    // Predicated region
    $region10: #{tpu_custom_call.1} parent=1 // pred_check
      _
    $region11: #{tpu_custom_call.1} parent=1 // pred_check_branch
      %38 = sbr.rel (0) target = $region13
    $region12: #{tpu_custom_call.1} parent=1 // pred_region
      %s40 = ssub.s32 64, 64
      %41 = vsyncadd [#allocation6], %s40
      %s43 = sshll.u32 [#allocation7], 4
      %s44 = int_to_ptr.vmem [resolvable:$true] %s43
      %46 = dma.hbm_to_vmem [thread:$0]  %s2, 64, %s44, [#allocation6]
    $region13: #{tpu_custom_call.1} parent=1 // pred_fallthru
      _
    // Predicated region
    $region14: #{tpu_custom_call.1} parent=1 // pred_check
      _
    $region15: #{tpu_custom_call.1} parent=1 // pred_check_branch
      %48 = sbr.rel (0) target = $region17
    $region16: #{tpu_custom_call.1} parent=1 // pred_region
      _
    $region17: #{tpu_custom_call.1} parent=1 // pred_fallthru
      _
    // Predicated region
    $region18: #{tpu_custom_call.1} parent=1 // pred_check
      _
    $region19: #{tpu_custom_call.1} parent=1 // pred_check_branch
      %50 = sbr.rel (0) target = $region21
    $region20: #{tpu_custom_call.1} parent=1 // pred_region
      %s52 = ssub.s32 1024, 1024
      %53 = vsyncadd [#allocation9], %s52
      %s54 = sshll.u32 [#allocation8], 4
      %s55 = int_to_ptr.vmem [resolvable:$true] %s54
      %60 = dma.hbm_to_vmem [thread:$0]  %s4, 1024, %s55, [#allocation9], 64, 64, 4
    $region21: #{tpu_custom_call.1} parent=1 // pred_fallthru
      _
    // Predicated region
    $region22: #{tpu_custom_call.1} parent=1 // pred_check
      _
    $region23: #{tpu_custom_call.1} parent=1 // pred_check_branch
      %62 = sbr.rel (0) target = $region25
    $region24: #{tpu_custom_call.1} parent=1 // pred_region
      _
    $region25: #{tpu_custom_call.1} parent=1 // pred_fallthru
      _
    // Predicated region
    $region26: #{tpu_custom_call.1} parent=1 // pred_check
      _
    $region27: #{tpu_custom_call.1} parent=1 // pred_check_branch
      %64 = sbr.rel (0) target = $region29
    $region28: #{tpu_custom_call.1} parent=1 // pred_region
      %s66 = ssub.s32 1024, 1024
      %67 = vsyncadd [#allocation9], %s66
      %s68 = sshll.u32 [#allocation10], 4
      %s69 = int_to_ptr.vmem [resolvable:$true] %s68
      %74 = dma.hbm_to_vmem [thread:$0]  %s6, 1024, %s69, [#allocation9], 64, 64, 4
    $region29: #{tpu_custom_call.1} parent=1 // pred_fallthru
      _
    // Predicated region
    $region30: #{tpu_custom_call.1} parent=1 // pred_check
      _
    $region31: #{tpu_custom_call.1} parent=1 // pred_check_branch
      %76 = sbr.rel (0) target = $region33
    $region32: #{tpu_custom_call.1} parent=1 // pred_region
      _
    $region33: #{tpu_custom_call.1} parent=1 // pred_fallthru
      _
    // Predicated region
    $region34: #{tpu_custom_call.1} parent=1 // pred_check
      _
    $region35: #{tpu_custom_call.1} parent=1 // pred_check_branch
      %78 = sbr.rel (0) target = $region37
    $region36: #{tpu_custom_call.1} parent=1 // pred_region
      %79 = dma.done [#allocation3], 64
    $region37: #{tpu_custom_call.1} parent=1 // pred_fallthru
      _
    // Predicated region
    $region38: #{tpu_custom_call.1} parent=1 // pred_check
      _
    $region39: #{tpu_custom_call.1} parent=1 // pred_check_branch
      %81 = sbr.rel (0) target = $region41
    $region40: #{tpu_custom_call.1} parent=1 // pred_region
      %82 = dma.done [#allocation6], 32
    $region41: #{tpu_custom_call.1} parent=1 // pred_fallthru
      _
    // Predicated region
    $region42: #{tpu_custom_call.1} parent=1 // pred_check
      _
    $region43: #{tpu_custom_call.1} parent=1 // pred_check_branch
      %84 = sbr.rel (0) target = $region45
    $region44: #{tpu_custom_call.1} parent=1 // pred_region
      %85 = dma.done [#allocation6], 64
    $region45: #{tpu_custom_call.1} parent=1 // pred_fallthru
      _
    // Predicated region
    $region46: #{tpu_custom_call.1} parent=1 // pred_check
      _
    $region47: #{tpu_custom_call.1} parent=1 // pred_check_branch
      %87 = sbr.rel (0) target = $region49
    $region48: #{tpu_custom_call.1} parent=1 // pred_region
      %88 = dma.done [#allocation9], 1024
    $region49: #{tpu_custom_call.1} parent=1 // pred_fallthru
      _
    // Predicated region
    $region50: #{tpu_custom_call.1} parent=1 // pred_check
      _
    $region51: #{tpu_custom_call.1} parent=1 // pred_check_branch
      %90 = sbr.rel (0) target = $region53
    $region52: #{tpu_custom_call.1} parent=1 // pred_region
      %91 = dma.done [#allocation9], 1024
    $region53: #{tpu_custom_call.1} parent=1 // pred_fallthru
      _
    %v93 = vld [vmem:[#allocation2] sm:$0xf]
    %v94 = vunpack.c.l.bf16 %v93
    %v95 = vld [vmem:[#allocation7] sm:$0xf]
    %v96 = vunpack.c.l.bf16 %v95
    %v97 = vld [vmem:[#allocation5] sm:$0x3]
    %v98 = vunpack.c.0.s8 %v97
    %v99 = vcvt.s32.f32 %v98
    %v100 = vld [vmem:[%s3] sm:$0x1]
    %v101 = vxor.u32 %v100, 2147483648
    %v102 = vmul.f32 %v101, 1.442695
    %v103 = vpow.pop %v102
    %v104 = vadd.f32 %v103, 1.0
    %v105 = vrcp.pop %v104
    %v106 = vmul.f32 1.0, %v105
    %v107 = vsub.f32 %v96, %v94
    %v109 = vlaneseq
    %v110 = vshrl.u32 %v109, 7
    %v111 = vsub.s32 0, %v110
    %v112 = vrot.slane %v106, %v111
    %v114 = vmul.f32 %v112, %v107
    %v115 = vmul.f32 %v99, %v114
    %v116 = vadd.f32 %v94, %v115
    %v117 = vpack.c.bf16 %v116, %v116
    %v118 = vld [vmem:[#allocation8] sm:$0xf]
    %v119 = vld [vmem:[#allocation8 + $0x4] sm:$0xf]
    %v120 = vld [vmem:[#allocation8 + $0x8] sm:$0xf]
    %v121 = vld [vmem:[#allocation8 + $0xc] sm:$0xf]
    %v122 = vld [vmem:[#allocation8 + $0x10] sm:$0xf]
    %v123 = vld [vmem:[#allocation8 + $0x14] sm:$0xf]
    %v124 = vld [vmem:[#allocation8 + $0x18] sm:$0xf]
    %v125 = vld [vmem:[#allocation8 + $0x1c] sm:$0xf]
    %v126 = vld [vmem:[#allocation8 + $0x20] sm:$0xf]
    %v127 = vld [vmem:[#allocation8 + $0x24] sm:$0xf]
    %v128 = vld [vmem:[#allocation8 + $0x28] sm:$0xf]
    %v129 = vld [vmem:[#allocation8 + $0x2c] sm:$0xf]
    %v130 = vld [vmem:[#allocation8 + $0x30] sm:$0xf]
    %v131 = vld [vmem:[#allocation8 + $0x34] sm:$0xf]
    %v132 = vld [vmem:[#allocation8 + $0x38] sm:$0xf]
    %v133 = vld [vmem:[#allocation8 + $0x3c] sm:$0xf]
    %v134 = vld [vmem:[%s5] sm:$0x1]
    %v136 = vlaneseq
    %v137 = vshrl.u32 %v136, 7
    %v138 = vsub.s32 0, %v137
    %v139 = vrot.slane %v134, %v138
    %v157 = vunpack.c.l.b16 %v118
    %v158 = vunpack.c.l.b16 %v119
    %v159 = vunpack.c.l.b16 %v120
    %v160 = vunpack.c.l.b16 %v121
    %v161 = vunpack.c.l.b16 %v122
    %v162 = vunpack.c.l.b16 %v123
    %v163 = vunpack.c.l.b16 %v124
    %v164 = vunpack.c.l.b16 %v125
    %v165 = vunpack.c.l.b16 %v126
    %v166 = vunpack.c.l.b16 %v127
    %v167 = vunpack.c.l.b16 %v128
    %v168 = vunpack.c.l.b16 %v129
    %v169 = vunpack.c.l.b16 %v130
    %v170 = vunpack.c.l.b16 %v131
    %v171 = vunpack.c.l.b16 %v132
    %v172 = vunpack.c.l.b16 %v133
    %v173 = vpack.c.b16 %v158, %v157
    %v174 = vpack.c.b16 %v160, %v159
    %v175 = vpack.c.b16 %v162, %v161
    %v176 = vpack.c.b16 %v164, %v163
    %v177 = vpack.c.b16 %v166, %v165
    %v178 = vpack.c.b16 %v168, %v167
    %v179 = vpack.c.b16 %v170, %v169
    %v180 = vpack.c.b16 %v172, %v171
    %189 = vmatprep.subr.bf16.mxu0 0
    %190 = vmatpush1.bf16.msra.mxu0 %v180
    %191 = vmatprep.subr.bf16.mxu0 0
    %192 = vmatpush1.bf16.msra.mxu0 %v179
    %193 = vmatprep.subr.bf16.mxu0 0
    %194 = vmatpush1.bf16.msra.mxu0 %v178
    %195 = vmatprep.subr.bf16.mxu0 0
    %196 = vmatpush1.bf16.msra.mxu0 %v177
    %197 = vmatprep.subr.bf16.mxu0 0
    %198 = vmatpush1.bf16.msra.mxu0 %v176
    %199 = vmatprep.subr.bf16.mxu0 0
    %200 = vmatpush1.bf16.msra.mxu0 %v175
    %201 = vmatprep.subr.bf16.mxu0 0
    %202 = vmatpush1.bf16.msra.mxu0 %v174
    %203 = vmatprep.subr.bf16.mxu0 0
    %204 = vmatpush1.bf16.msra.mxu0 %v173
    %205 = vmatprep.subr.bf16.mxu0 0
    %206 = vmatpush2.bf16.msra.mxu0 0
    %207 = vmatprep.subr.bf16.mxu0 0
    %208 = vmatpush2.bf16.msra.mxu0 0
    %209 = vmatprep.subr.bf16.mxu0 0
    %210 = vmatpush2.bf16.msra.mxu0 0
    %211 = vmatprep.subr.bf16.mxu0 0
    %212 = vmatpush2.bf16.msra.mxu0 0
    %213 = vmatprep.subr.bf16.mxu0 0
    %214 = vmatpush2.bf16.msra.mxu0 0
    %215 = vmatprep.subr.bf16.mxu0 0
    %216 = vmatpush2.bf16.msra.mxu0 0
    %217 = vmatprep.subr.bf16.mxu0 0
    %218 = vmatpush2.bf16.msra.mxu0 0
    %219 = vmatprep.subr.bf16.mxu0 0
    %220 = vmatpush2.bf16.msra.mxu0 0
    %221 = vmatprep.mubr.bf16.mxu0 0
    %222 = vmatmul.mubr.bf16.gmra.mxu0 %v117
    %v223 = vpop.f32.mrf.mxu0
    %v224 = vadd.f32 %v139, %v223
    %v225 = vpop.f32.mrf.mxu0
    %v226 = vpop.f32.mrf.mxu0
    %v227 = vpop.f32.mrf.mxu0
    %228 = vdwg.mxu0
    %v229 = vmax.f32 %v224, 0.0
    %v230 = vpack.c.bf16 %v229, %v229
    %v231 = vld [vmem:[#allocation10] sm:$0xf]
    %v232 = vld [vmem:[#allocation10 + $0x4] sm:$0xf]
    %v233 = vld [vmem:[#allocation10 + $0x8] sm:$0xf]
    %v234 = vld [vmem:[#allocation10 + $0xc] sm:$0xf]
    %v235 = vld [vmem:[#allocation10 + $0x10] sm:$0xf]
    %v236 = vld [vmem:[#allocation10 + $0x14] sm:$0xf]
    %v237 = vld [vmem:[#allocation10 + $0x18] sm:$0xf]
    %v238 = vld [vmem:[#allocation10 + $0x1c] sm:$0xf]
    %v239 = vld [vmem:[#allocation10 + $0x20] sm:$0xf]
    %v240 = vld [vmem:[#allocation10 + $0x24] sm:$0xf]
    %v241 = vld [vmem:[#allocation10 + $0x28] sm:$0xf]
    %v242 = vld [vmem:[#allocation10 + $0x2c] sm:$0xf]
    %v243 = vld [vmem:[#allocation10 + $0x30] sm:$0xf]
    %v244 = vld [vmem:[#allocation10 + $0x34] sm:$0xf]
    %v245 = vld [vmem:[#allocation10 + $0x38] sm:$0xf]
    %v246 = vld [vmem:[#allocation10 + $0x3c] sm:$0xf]
    %v247 = vld [vmem:[%s7] sm:$0x1]
    %v249 = vlaneseq
    %v250 = vshrl.u32 %v249, 7
    %v251 = vsub.s32 0, %v250
    %v252 = vrot.slane %v247, %v251
    %v270 = vunpack.c.l.b16 %v231
    %v271 = vunpack.c.l.b16 %v232
    %v272 = vunpack.c.l.b16 %v233
    %v273 = vunpack.c.l.b16 %v234
    %v274 = vunpack.c.l.b16 %v235
    %v275 = vunpack.c.l.b16 %v236
    %v276 = vunpack.c.l.b16 %v237
    %v277 = vunpack.c.l.b16 %v238
    %v278 = vunpack.c.l.b16 %v239
    %v279 = vunpack.c.l.b16 %v240
    %v280 = vunpack.c.l.b16 %v241
    %v281 = vunpack.c.l.b16 %v242
    %v282 = vunpack.c.l.b16 %v243
    %v283 = vunpack.c.l.b16 %v244
    %v284 = vunpack.c.l.b16 %v245
    %v285 = vunpack.c.l.b16 %v246
    %v286 = vpack.c.b16 %v271, %v270
    %v287 = vpack.c.b16 %v273, %v272
    %v288 = vpack.c.b16 %v275, %v274
    %v289 = vpack.c.b16 %v277, %v276
    %v290 = vpack.c.b16 %v279, %v278
    %v291 = vpack.c.b16 %v281, %v280
    %v292 = vpack.c.b16 %v283, %v282
    %v293 = vpack.c.b16 %v285, %v284
    %302 = vmatprep.subr.bf16.mxu0 0
    %303 = vmatpush1.bf16.msra.mxu0 %v293
    %304 = vmatprep.subr.bf16.mxu0 0
    %305 = vmatpush1.bf16.msra.mxu0 %v292
    %306 = vmatprep.subr.bf16.mxu0 0
    %307 = vmatpush1.bf16.msra.mxu0 %v291
    %308 = vmatprep.subr.bf16.mxu0 0
    %309 = vmatpush1.bf16.msra.mxu0 %v290
    %310 = vmatprep.subr.bf16.mxu0 0
    %311 = vmatpush1.bf16.msra.mxu0 %v289
    %312 = vmatprep.subr.bf16.mxu0 0
    %313 = vmatpush1.bf16.msra.mxu0 %v288
    %314 = vmatprep.subr.bf16.mxu0 0
    %315 = vmatpush1.bf16.msra.mxu0 %v287
    %316 = vmatprep.subr.bf16.mxu0 0
    %317 = vmatpush1.bf16.msra.mxu0 %v286
    %318 = vmatprep.subr.bf16.mxu0 0
    %319 = vmatpush2.bf16.msra.mxu0 0
    %320 = vmatprep.subr.bf16.mxu0 0
    %321 = vmatpush2.bf16.msra.mxu0 0
    %322 = vmatprep.subr.bf16.mxu0 0
    %323 = vmatpush2.bf16.msra.mxu0 0
    %324 = vmatprep.subr.bf16.mxu0 0
    %325 = vmatpush2.bf16.msra.mxu0 0
    %326 = vmatprep.subr.bf16.mxu0 0
    %327 = vmatpush2.bf16.msra.mxu0 0
    %328 = vmatprep.subr.bf16.mxu0 0
    %329 = vmatpush2.bf16.msra.mxu0 0
    %330 = vmatprep.subr.bf16.mxu0 0
    %331 = vmatpush2.bf16.msra.mxu0 0
    %332 = vmatprep.subr.bf16.mxu0 0
    %333 = vmatpush2.bf16.msra.mxu0 0
    %334 = vmatprep.mubr.bf16.mxu0 0
    %335 = vmatmul.mubr.bf16.gmra.mxu0 %v230
    %v336 = vpop.f32.mrf.mxu0
    %v337 = vadd.f32 %v252, %v336
    %v338 = vpop.f32.mrf.mxu0
    %v339 = vpop.f32.mrf.mxu0
    %v340 = vpop.f32.mrf.mxu0
    %341 = vdwg.mxu0
    %342 = vst [vmem:[#allocation11] sm:$0xff] %v337
    // Predicated region
    $region54: #{tpu_custom_call.1} parent=1 // pred_check
      _
    $region55: #{tpu_custom_call.1} parent=1 // pred_check_branch
      %344 = sbr.rel (0) target = $region57
    $region56: #{tpu_custom_call.1} parent=1 // pred_region
      %s346 = ssub.s32 128, 128
      %347 = vsyncadd [#allocation4], %s346
      %s349 = sshll.u32 [#allocation11], 4
      %s350 = int_to_ptr.vmem [resolvable:$true] %s349
      %352 = dma.vmem_to_hbm [thread:$0]  %s350, 128, %s8, [#allocation4]
    $region57: #{tpu_custom_call.1} parent=1 // pred_fallthru
      _
    // Predicated region
    $region58: #{tpu_custom_call.1} parent=1 // pred_check
      _
    $region59: #{tpu_custom_call.1} parent=1 // pred_check_branch
      %354 = sbr.rel (0) target = $region61
    $region60: #{tpu_custom_call.1} parent=1 // pred_region
      %355 = dma.done [#allocation4], 128
    $region61: #{tpu_custom_call.1} parent=1 // pred_fallthru
      _
    %356 = vsyncpa [#allocation3], 1
    %357 = vsyncpa [#allocation6], 1
    %358 = vsyncpa [#allocation9], 1
    %359 = vsyncpa [#allocation4], 1

</llo_original>
